<compile_context>
chip_gen: v7x
topology: tpu7x:2x2x1
jax: 0.10.0
libtpu: 0.0.40
codegen_flags: <defaults>
</compile_context>

<pallas_src>
import functools

import jax
import jax.numpy as jnp
from jax.experimental import pallas as pl
from jax.experimental.pallas import tpu as pltpu


def _self_attention_kernel(x_ref, wqkv_ref, wout_ref, o_ref, *,
                           num_heads, dim_per_head):
    """One batch element per grid step, all heads batched inside the kernel."""
    h, dh = num_heads, dim_per_head
    _, l, d = x_ref.shape

    x = x_ref[0].astype(jnp.bfloat16)                         # (l, d)
    xh = jnp.broadcast_to(x[None], (h, l, d))                 # (h, l, d) bf16

    # i. QKV projection, head-batched.  w_qkv was pre-arranged on the host to
    #    (h, d, 3*dh) with the softmax scale already folded into the q columns.
    qkv = jnp.einsum('hld,hdk->hlk', xh, wqkv_ref[...],
                     preferred_element_type=jnp.float32)      # (h, l, 3*dh) f32

    q = qkv[..., :dh].astype(jnp.bfloat16)                    # scale pre-applied
    k = qkv[..., dh:2 * dh].astype(jnp.bfloat16)
    v = qkv[..., 2 * dh:].astype(jnp.bfloat16)

    # ii. scores + softmax (softmax math in f32; divide goes to the EUP).
    s = jnp.einsum('hld,hmd->hlm', q, k,
                   preferred_element_type=jnp.float32)        # (h, l, l) f32
    s = s - jnp.max(s, axis=-1, keepdims=True)
    p = jnp.exp(s)
    p = p * pl.reciprocal(jnp.sum(p, axis=-1, keepdims=True), approx=True)

    # iii. attention @ V
    z = jnp.einsum('hlm,hmd->hld', p.astype(jnp.bfloat16), v,
                   preferred_element_type=jnp.float32)        # (h, l, dh) f32

    # iv. output projection folded per head: out = sum_h z_h @ w_out_h.
    #     (Dropout(p=0.0) is identity.)
    oh = jnp.einsum('hld,hdo->hlo', z.astype(jnp.bfloat16), wout_ref[...],
                    preferred_element_type=jnp.float32)       # (h, l, d) f32

    # Leading-axis reduction = plain VPU adds of (l, d) tiles; unrolled
    # statically (h is small) for lowering robustness.
    out = oh[0]
    for j in range(1, h):
        out = out + oh[j]
    o_ref[0] = out.astype(o_ref.dtype)


def self_attention_pallas(x, w_qkv, w_out, *, num_heads, dim_per_head):
    b, l, d = x.shape
    h, dh = num_heads, dim_per_head
    inner = h * dh
    assert w_qkv.shape == (d, 3 * inner)
    assert w_out.shape == (inner, d)
    scale = dh ** (-0.5)

    # Host-side weight prep (once per call, fused by XLA):
    #  - fold the softmax scale into the q columns,
    #  - rearrange to head-major (h, d, 3*dh) / (h, dh, d),
    #  - cast MXU operands to bf16 (f32 accumulation happens inside the kernel).
    w3 = w_qkv.reshape(d, 3, h, dh)
    w3 = w3 * jnp.asarray([scale, 1.0, 1.0], w3.dtype)[None, :, None, None]
    w_qkv_h = jnp.transpose(w3, (2, 0, 1, 3)).reshape(h, d, 3 * dh)
    w_qkv_h = w_qkv_h.astype(jnp.bfloat16)
    w_out_h = w_out.reshape(h, dh, d).astype(jnp.bfloat16)

    kernel = functools.partial(_self_attention_kernel,
                               num_heads=h, dim_per_head=dh)

    return pl.pallas_call(
        kernel,
        out_shape=jax.ShapeDtypeStruct((b, l, d), x.dtype),
        grid=(b,),
        in_specs=[
            pl.BlockSpec((1, l, d), lambda i: (i, 0, 0)),        # x: one batch elem
            pl.BlockSpec((h, d, 3 * dh), lambda i: (0, 0, 0)),   # w_qkv_h: resident
            pl.BlockSpec((h, dh, d), lambda i: (0, 0, 0)),       # w_out_h: resident
        ],
        out_specs=pl.BlockSpec((1, l, d), lambda i: (i, 0, 0)),
        compiler_params=pltpu.CompilerParams(
            dimension_semantics=("parallel",),
            vmem_limit_bytes=32 * 1024 * 1024,
        ),
    )(x, w_qkv_h, w_out_h)


def self_attention_ref(x, w_qkv, w_out, *, num_heads, dim_per_head):
    """Pure-JAX f32 reference mirroring the PyTorch forward exactly."""
    b, l, d = x.shape
    inner = num_heads * dim_per_head
    scale = dim_per_head ** (-0.5)

    qkv = x @ w_qkv                                         # (b, l, 3*inner)
    qkv = qkv.reshape(b, l, 3, num_heads, dim_per_head)
    qkv = jnp.transpose(qkv, (2, 0, 3, 1, 4))               # (3, b, h, l, dh)
    q, k, v = qkv[0], qkv[1], qkv[2]
    attn = jax.nn.softmax(jnp.einsum('bhld,bhmd->bhlm', q, k) * scale, axis=-1)
    z = jnp.einsum('bhlm,bhmd->bhld', attn, v)              # (b, h, l, dh)
    z = jnp.transpose(z, (0, 2, 1, 3)).reshape(b, l, inner)
    return z @ w_out


if __name__ == "__main__":
    # Small shapes consistent with the module's forward: x of shape (b, l, d).
    b, l, d = 2, 8, 32
    num_heads, dim_per_head = 4, 8
    inner = num_heads * dim_per_head                         # 32

    key = jax.random.PRNGKey(0)
    kx, kq, ko = jax.random.split(key, 3)

    x = jax.random.normal(kx, (b, l, d), dtype=jnp.float32)
    # Deterministic synthetic parameters (no checkpoint load).
    w_qkv = (jax.random.uniform(kq, (d, 3 * inner), dtype=jnp.float32,
                                minval=-1.0, maxval=1.0) * (d ** -0.5))
    w_out = (jax.random.uniform(ko, (inner, d), dtype=jnp.float32,
                                minval=-1.0, maxval=1.0) * (inner ** -0.5))

    out = self_attention_pallas(x, w_qkv, w_out,
                                num_heads=num_heads,
                                dim_per_head=dim_per_head)
    out = jax.block_until_ready(out)

    ref = self_attention_ref(x, w_qkv, w_out,
                             num_heads=num_heads,
                             dim_per_head=dim_per_head)
    assert out.shape == (b, l, d)
    # Tolerance relaxed vs. the pure-f32 reference because MXU operands are
    # cast to bf16 (f32 accumulation) and the softmax uses the EUP approximate
    # reciprocal; error stays well below 2e-2 at these magnitudes.
    max_err = float(jnp.max(jnp.abs(out - ref)))
    assert jnp.allclose(out, ref, atol=2e-2, rtol=2e-2), f"max abs err {max_err}"

    print("KERNEL_OK")
</pallas_src>

<mosaic_0001>
module attributes {stable_mosaic.version = 11 : i64} {
  func.func @_self_attention_kernel(%arg0: i32, %arg1: memref<1x8x32xf32, #tpu.memory_space<vmem>>, %arg2: memref<4x32x24xbf16, #tpu.memory_space<vmem>>, %arg3: memref<4x8x32xbf16, #tpu.memory_space<vmem>>, %arg4: memref<1x8x32xf32, #tpu.memory_space<vmem>>) attributes {dimension_semantics = [#tpu.dimension_semantics<parallel>], iteration_bounds = array<i64: 2>, scalar_prefetch = 0 : i64, scratch_operands = 0 : i64, tpu.core_type = #tpu.core_type<tc>, window_params = [{transform_indices = @transform_0, window_bounds = array<i64: 1, 8, 32>}, {pipeline_mode = #tpu.pipeline_mode<synchronous>, transform_indices = @transform_1, window_bounds = array<i64: 4, 32, 24>}, {pipeline_mode = #tpu.pipeline_mode<synchronous>, transform_indices = @transform_2, window_bounds = array<i64: 4, 8, 32>}, {transform_indices = @transform_3, window_bounds = array<i64: 1, 8, 32>}]} {
    %c0 = arith.constant 0 : index
    %c0_0 = arith.constant 0 : index
    %c0_1 = arith.constant 0 : index
    %0 = vector.load %arg1[%c0, %c0_0, %c0_1] : memref<1x8x32xf32, #tpu.memory_space<vmem>>, vector<1x8x32xf32>
    %1 = vector.shape_cast %0 : vector<1x8x32xf32> to vector<8x32xf32>
    %2 = arith.truncf %1 : vector<8x32xf32> to vector<8x32xbf16>
    %3 = vector.shape_cast %2 : vector<8x32xbf16> to vector<1x8x32xbf16>
    %4 = vector.shape_cast %3 : vector<1x8x32xbf16> to vector<1x8x32xbf16>
    %5 = vector.broadcast %4 : vector<1x8x32xbf16> to vector<4x8x32xbf16>
    %c0_2 = arith.constant 0 : index
    %c0_3 = arith.constant 0 : index
    %c0_4 = arith.constant 0 : index
    %6 = vector.load %arg2[%c0_2, %c0_3, %c0_4] : memref<4x32x24xbf16, #tpu.memory_space<vmem>>, vector<4x32x24xbf16>
    "tpu.trace_start"() <{level = 10 : i32, message = "hld,hdk->hlk"}> : () -> ()
    %cst = arith.constant dense<0.000000e+00> : vector<4x8x24xf32>
    %7 = tpu.matmul %5, %6, %cst {dimension_numbers = #tpu.dot_dimension_numbers<[2], [1], [1], [2], [0, 0, 0, 1, 1, 2], [0], [0]>} : vector<4x8x32xbf16>, vector<4x32x24xbf16>, vector<4x8x24xf32> -> vector<4x8x24xf32>
    "tpu.trace_stop"() : () -> ()
    %8 = vector.extract_strided_slice %7 {offsets = [0, 0, 0], sizes = [4, 8, 8], strides = [1, 1, 1]} : vector<4x8x24xf32> to vector<4x8x8xf32>
    %9 = arith.truncf %8 : vector<4x8x8xf32> to vector<4x8x8xbf16>
    %10 = vector.extract_strided_slice %7 {offsets = [0, 0, 8], sizes = [4, 8, 8], strides = [1, 1, 1]} : vector<4x8x24xf32> to vector<4x8x8xf32>
    %11 = arith.truncf %10 : vector<4x8x8xf32> to vector<4x8x8xbf16>
    %12 = vector.extract_strided_slice %7 {offsets = [0, 0, 16], sizes = [4, 8, 8], strides = [1, 1, 1]} : vector<4x8x24xf32> to vector<4x8x8xf32>
    %13 = arith.truncf %12 : vector<4x8x8xf32> to vector<4x8x8xbf16>
    "tpu.trace_start"() <{level = 10 : i32, message = "hld,hmd->hlm"}> : () -> ()
    %cst_5 = arith.constant dense<0.000000e+00> : vector<4x8x8xf32>
    %14 = tpu.matmul %9, %11, %cst_5 {dimension_numbers = #tpu.dot_dimension_numbers<[2], [2], [1], [1], [0, 0, 0, 1, 1, 1], [0], [0]>} : vector<4x8x8xbf16>, vector<4x8x8xbf16>, vector<4x8x8xf32> -> vector<4x8x8xf32>
    "tpu.trace_stop"() : () -> ()
    %cst_6 = arith.constant dense<0xFF800000> : vector<4x8xf32>
    %15 = vector.multi_reduction <maximumf>, %14, %cst_6 [2] : vector<4x8x8xf32> to vector<4x8xf32>
    %16 = vector.shape_cast %15 : vector<4x8xf32> to vector<4x8x1xf32>
    %17 = vector.broadcast %16 : vector<4x8x1xf32> to vector<4x8x8xf32>
    %18 = arith.subf %14, %17 : vector<4x8x8xf32>
    %19 = math.exp %18 : vector<4x8x8xf32>
    %cst_7 = arith.constant dense<0.000000e+00> : vector<4x8xf32>
    %20 = vector.multi_reduction <add>, %19, %cst_7 [2] : vector<4x8x8xf32> to vector<4x8xf32>
    %21 = vector.shape_cast %20 : vector<4x8xf32> to vector<4x8x1xf32>
    %22 = tpu.reciprocal %21 {approx = true} : vector<4x8x1xf32> -> vector<4x8x1xf32>
    %23 = vector.broadcast %22 : vector<4x8x1xf32> to vector<4x8x8xf32>
    %24 = arith.mulf %19, %23 : vector<4x8x8xf32>
    %25 = arith.truncf %24 : vector<4x8x8xf32> to vector<4x8x8xbf16>
    "tpu.trace_start"() <{level = 10 : i32, message = "hlm,hmd->hld"}> : () -> ()
    %cst_8 = arith.constant dense<0.000000e+00> : vector<4x8x8xf32>
    %26 = tpu.matmul %25, %13, %cst_8 {dimension_numbers = #tpu.dot_dimension_numbers<[2], [1], [1], [2], [0, 0, 0, 1, 1, 2], [0], [0]>} : vector<4x8x8xbf16>, vector<4x8x8xbf16>, vector<4x8x8xf32> -> vector<4x8x8xf32>
    "tpu.trace_stop"() : () -> ()
    %27 = arith.truncf %26 : vector<4x8x8xf32> to vector<4x8x8xbf16>
    %c0_9 = arith.constant 0 : index
    %c0_10 = arith.constant 0 : index
    %c0_11 = arith.constant 0 : index
    %28 = vector.load %arg3[%c0_9, %c0_10, %c0_11] : memref<4x8x32xbf16, #tpu.memory_space<vmem>>, vector<4x8x32xbf16>
    "tpu.trace_start"() <{level = 10 : i32, message = "hld,hdo->hlo"}> : () -> ()
    %cst_12 = arith.constant dense<0.000000e+00> : vector<4x8x32xf32>
    %29 = tpu.matmul %27, %28, %cst_12 {dimension_numbers = #tpu.dot_dimension_numbers<[2], [1], [1], [2], [0, 0, 0, 1, 1, 2], [0], [0]>} : vector<4x8x8xbf16>, vector<4x8x32xbf16>, vector<4x8x32xf32> -> vector<4x8x32xf32>
    "tpu.trace_stop"() : () -> ()
    %30 = vector.extract_strided_slice %29 {offsets = [0, 0, 0], sizes = [1, 8, 32], strides = [1, 1, 1]} : vector<4x8x32xf32> to vector<1x8x32xf32>
    %31 = vector.shape_cast %30 : vector<1x8x32xf32> to vector<8x32xf32>
    %32 = vector.extract_strided_slice %29 {offsets = [1, 0, 0], sizes = [1, 8, 32], strides = [1, 1, 1]} : vector<4x8x32xf32> to vector<1x8x32xf32>
    %33 = vector.shape_cast %32 : vector<1x8x32xf32> to vector<8x32xf32>
    %34 = arith.addf %31, %33 : vector<8x32xf32>
    %35 = vector.extract_strided_slice %29 {offsets = [2, 0, 0], sizes = [1, 8, 32], strides = [1, 1, 1]} : vector<4x8x32xf32> to vector<1x8x32xf32>
    %36 = vector.shape_cast %35 : vector<1x8x32xf32> to vector<8x32xf32>
    %37 = arith.addf %34, %36 : vector<8x32xf32>
    %38 = vector.extract_strided_slice %29 {offsets = [3, 0, 0], sizes = [1, 8, 32], strides = [1, 1, 1]} : vector<4x8x32xf32> to vector<1x8x32xf32>
    %39 = vector.shape_cast %38 : vector<1x8x32xf32> to vector<8x32xf32>
    %40 = arith.addf %37, %39 : vector<8x32xf32>
    %c0_13 = arith.constant 0 : index
    %c0_14 = arith.constant 0 : index
    %c0_15 = arith.constant 0 : index
    %41 = vector.load %arg4[%c0_13, %c0_14, %c0_15] : memref<1x8x32xf32, #tpu.memory_space<vmem>>, vector<1x8x32xf32>
    %42 = vector.shape_cast %41 : vector<1x8x32xf32> to vector<8x32xf32>
    %43 = vector.shape_cast %40 : vector<8x32xf32> to vector<1x8x32xf32>
    tpu.vector_store %arg4[%c0_13, %c0_14, %c0_15], %43 {strides = array<i32>} : memref<1x8x32xf32, #tpu.memory_space<vmem>>, vector<1x8x32xf32>,
    return
  }
  func.func @transform_0(%arg0: i32) -> (i32, i32, i32) {
    %c0_i32 = arith.constant 0 : i32
    %c0_i32_0 = arith.constant 0 : i32
    %c0_i32_1 = arith.constant 0 : i32
    return %arg0, %c0_i32, %c0_i32_0 : i32, i32, i32
  }
  func.func @transform_1(%arg0: i32) -> (i32, i32, i32) {
    %c0_i32 = arith.constant 0 : i32
    %c0_i32_0 = arith.constant 0 : i32
    %c0_i32_1 = arith.constant 0 : i32
    %c0_i32_2 = arith.constant 0 : i32
    return %c0_i32, %c0_i32_0, %c0_i32_1 : i32, i32, i32
  }
  func.func @transform_2(%arg0: i32) -> (i32, i32, i32) {
    %c0_i32 = arith.constant 0 : i32
    %c0_i32_0 = arith.constant 0 : i32
    %c0_i32_1 = arith.constant 0 : i32
    %c0_i32_2 = arith.constant 0 : i32
    return %c0_i32, %c0_i32_0, %c0_i32_1 : i32, i32, i32
  }
  func.func @transform_3(%arg0: i32) -> (i32, i32, i32) {
    %c0_i32 = arith.constant 0 : i32
    %c0_i32_0 = arith.constant 0 : i32
    %c0_i32_1 = arith.constant 0 : i32
    return %arg0, %c0_i32, %c0_i32_0 : i32, i32, i32
  }
}

</mosaic_0001>

<llo_original>
// kernel: tpu_custom_call.1
$region0: #{tpu_custom_call.1}
  #allocation0 [shape = 'u32[]', space=smem, size = 0x4, offset = 0x4, fixed_abs, tag = 'smem constant byte address 0x4 - core index']
  #allocation1 [shape = 'u32[144,128]{1,0:T(1,128)}', space=vmem, size = 0x12000, scoped, tag = 'internal scratch']
  %s0 = inlined_call_operand.vmem [shape: f32[2,8,32], index: 0, kind: input, shape index: {}]
  %s1 = inlined_call_operand.vmem [shape: bf16[4,32,24], index: 1, kind: input, shape index: {}]
  %s2 = inlined_call_operand.vmem [shape: bf16[4,8,32], index: 2, kind: input, shape index: {}]
  %s3 = inlined_call_operand.hbm [shape: f32[2,8,32], index: 3, kind: output, shape index: {}]
  %s4 = sld [smem:[#allocation0]]
  $region45: #{tpu_custom_call.1} parent=0
    _
  %s6 = ssub.s32 1, %s4
  %s7 = scalar_select 0, %s6, %s4
  $region1: #{tpu_custom_call.1} parent=0
    #allocation2 [shape = 'u8[8192]{0}', space=vmem, size = 0x2000, scoped, tag = 'output window, operand 0']
    #allocation3 [shape = 's32[2]{0}', space=sflag, size = 0x8, scoped, tag = 'scoped memory for tpu_custom_call.1']
    %8 = vsyncpa [#allocation3], 0
    %s9 = scalar_lea.sflag [#allocation3], 1
    %10 = vsyncpa %s9, 0
    loop: start=0, step=1, limit=4
    $region2: #{tpu_custom_call.1} parent=1 // loop_pre_header
      _
    $region3: #{tpu_custom_call.1} parent=1 // loop_header
      %s12 = sphi 0, %s16
      %p13 = scmp.ge.s32.totalorder %s12, 4
      %s22 = sphi 0, %s24
      %s25 = sphi 0, %s22
      %s26 = sphi 0, %s25
      %s42 = sphi 0, %s26
      %s46 = sphi 0, %s46
      %s48 = sphi 0, %s46
      %s49 = sphi 0, %s48
      %s63 = sphi 0, %s49
      %s67 = sphi 0, %s67
      %s69 = sphi 0, %s67
      %s70 = sphi 0, %s69
      %s84 = sphi 0, %s70
      %s90 = sphi 0, %s92
      %s93 = sphi 0, %s90
      %s94 = sphi 0, %s93
      %s110 = sphi 0, %s94
    $region4: #{tpu_custom_call.1} parent=1 // loop_header_branch
      %15 = sbr.rel (%p13) target = $region8
    $region5: #{tpu_custom_call.1} parent=1 // loop_body
      %s17 = ssub.s32 %s12, 1
      %s18 = ssub.s32 %s12, 2
      %s19 = sadd.s32 %s12, 1
      %s20 = ssub.s32 %s12, %s19
      %p21 = scmp.eq.s32.totalorder %s20, 0
      %s23 = sadd.s32 %s22, 1
      %s24 = scalar_select %p21, %s22, %s23
      %p27 = pneg %p21
      %p28 = scmp.eq.s32.totalorder %s12, 1
      %p29 = por %p27, %p28
      %p30 = scmp.ne.s32.totalorder %s22, %s25
      %p31 = scmp.eq.s32.totalorder %s12, 0
      %p32 = por %p30, %p31
      %p33 = scmp.ne.s32.totalorder %s22, %s25
      %p34 = scmp.eq.s32.totalorder %s17, 1
      %p35 = por %p33, %p34
      %p36 = scmp.ne.s32.totalorder %s25, %s26
      %p37 = scmp.eq.s32.totalorder %s17, 0
      %p38 = por %p36, %p37
      %p39 = scmp.ne.s32.totalorder %s25, %s26
      %p40 = scmp.eq.s32.totalorder %s18, 1
      %p41 = por %p39, %p40
      %p43 = scmp.ne.s32.totalorder %s26, %s42
      %p44 = scmp.eq.s32.totalorder %s18, 0
      %p45 = por %p43, %p44
      %s47 = sadd.s32 %s46, 1
      %p50 = scmp.eq.s32.totalorder %s12, 1
      %p51 = scmp.ne.s32.totalorder %s46, %s48
      %p52 = scmp.eq.s32.totalorder %s12, 0
      %p53 = por %p51, %p52
      %p54 = scmp.ne.s32.totalorder %s46, %s48
      %p55 = scmp.eq.s32.totalorder %s17, 1
      %p56 = por %p54, %p55
      %p57 = scmp.ne.s32.totalorder %s48, %s49
      %p58 = scmp.eq.s32.totalorder %s17, 0
      %p59 = por %p57, %p58
      %p60 = scmp.ne.s32.totalorder %s48, %s49
      %p61 = scmp.eq.s32.totalorder %s18, 1
      %p62 = por %p60, %p61
      %p64 = scmp.ne.s32.totalorder %s49, %s63
      %p65 = scmp.eq.s32.totalorder %s18, 0
      %p66 = por %p64, %p65
      %s68 = sadd.s32 %s67, 1
      %p71 = scmp.eq.s32.totalorder %s12, 1
      %p72 = scmp.ne.s32.totalorder %s67, %s69
      %p73 = scmp.eq.s32.totalorder %s12, 0
      %p74 = por %p72, %p73
      %p75 = scmp.ne.s32.totalorder %s67, %s69
      %p76 = scmp.eq.s32.totalorder %s17, 1
      %p77 = por %p75, %p76
      %p78 = scmp.ne.s32.totalorder %s69, %s70
      %p79 = scmp.eq.s32.totalorder %s17, 0
      %p80 = por %p78, %p79
      %p81 = scmp.ne.s32.totalorder %s69, %s70
      %p82 = scmp.eq.s32.totalorder %s18, 1
      %p83 = por %p81, %p82
      %p85 = scmp.ne.s32.totalorder %s70, %s84
      %p86 = scmp.eq.s32.totalorder %s18, 0
      %p87 = por %p85, %p86
      %s88 = ssub.s32 %s12, %s19
      %p89 = scmp.eq.s32.totalorder %s88, 0
      %s91 = sadd.s32 %s90, 1
      %s92 = scalar_select %p89, %s90, %s91
      %p95 = pneg %p89
      %p96 = scmp.eq.s32.totalorder %s12, 1
      %p97 = por %p95, %p96
      %p98 = scmp.ne.s32.totalorder %s90, %s93
      %p99 = scmp.eq.s32.totalorder %s12, 0
      %p100 = por %p98, %p99
      %p101 = scmp.ne.s32.totalorder %s90, %s93
      %p102 = scmp.eq.s32.totalorder %s17, 1
      %p103 = por %p101, %p102
      %p104 = scmp.ne.s32.totalorder %s93, %s94
      %p105 = scmp.eq.s32.totalorder %s17, 0
      %p106 = por %p104, %p105
      %p107 = scmp.ne.s32.totalorder %s93, %s94
      %p108 = scmp.eq.s32.totalorder %s18, 1
      %p109 = por %p107, %p108
      %p111 = scmp.ne.s32.totalorder %s94, %s110
      %p112 = scmp.eq.s32.totalorder %s18, 0
      %p113 = por %p111, %p112
      %p114 = scmp.le.s32.totalorder 1, %s12
      %p115 = scmp.lt.s32.totalorder %s12, 3
      %p116 = pnand %p114, %p115
      %p117 = pneg %p116
      // Predicated region
      $region9: #{tpu_custom_call.1} parent=5 // pred_check
        _
      $region10: #{tpu_custom_call.1} parent=5 // pred_check_branch
        %119 = sbr.rel (%p116) target = $region12
      $region11: #{tpu_custom_call.1} parent=5 // pred_region
        %s120 = ssub.s32 %s12, 1
        // Predicated region
        $region13: #{tpu_custom_call.1} parent=11 // pred_check
          %p121 = pneg %p59
        $region14: #{tpu_custom_call.1} parent=11 // pred_check_branch
          %123 = sbr.rel (%p121) target = $region16
        $region15: #{tpu_custom_call.1} parent=11 // pred_region
          _
        $region16: #{tpu_custom_call.1} parent=11 // pred_fallthru
          _
        // Predicated region
        $region17: #{tpu_custom_call.1} parent=11 // pred_check
          %p124 = pneg %p80
        $region18: #{tpu_custom_call.1} parent=11 // pred_check_branch
          %126 = sbr.rel (%p124) target = $region20
        $region19: #{tpu_custom_call.1} parent=11 // pred_region
          _
        $region20: #{tpu_custom_call.1} parent=11 // pred_fallthru
          _
      $region12: #{tpu_custom_call.1} parent=5 // pred_fallthru
        _
      %p127 = scmp.lt.s32.totalorder %s12, 2
      // Predicated region
      $region21: #{tpu_custom_call.1} parent=5 // pred_check
        %p128 = pneg %p127
      $region22: #{tpu_custom_call.1} parent=5 // pred_check_branch
        %130 = sbr.rel (%p128) target = $region24
      $region23: #{tpu_custom_call.1} parent=5 // pred_region
        // Predicated region
        $region25: #{tpu_custom_call.1} parent=23 // pred_check
          %p131 = pneg %p32
        $region26: #{tpu_custom_call.1} parent=23 // pred_check_branch
          %133 = sbr.rel (%p131) target = $region28
        $region27: #{tpu_custom_call.1} parent=23 // pred_region
          %p134 = scmp.lt.s32.totalorder %s12, 1
          %s135 = scalar_select %p134, %s12, 1
          %s136 = smul.addr %s135, 8
          %s137 = scalar_lea.vmem %s0, %s136
        $region28: #{tpu_custom_call.1} parent=23 // pred_fallthru
          _
      $region24: #{tpu_custom_call.1} parent=5 // pred_fallthru
        _
      %p138 = scmp.le.s32.totalorder 1, %s12
      %p139 = scmp.lt.s32.totalorder %s12, 3
      %p140 = pnand %p138, %p139
      %p141 = pneg %p140
      // Predicated region
      $region29: #{tpu_custom_call.1} parent=5 // pred_check
        _
      $region30: #{tpu_custom_call.1} parent=5 // pred_check_branch
        %143 = sbr.rel (%p140) target = $region32
      $region31: #{tpu_custom_call.1} parent=5 // pred_region
        %s144 = ssub.s32 %s12, 1
        %p145 = scmp.lt.s32.totalorder %s17, 1
        %s146 = scalar_select %p145, %s17, 1
        %s147 = smul.addr %s146, 8
        %s148 = scalar_lea.vmem %s0, %s147
        %p149 = pneg %p38
        %p150 = pneg %p35
        %p151 = pneg %p59
        %p152 = pneg %p56
        %p153 = pneg %p80
        %p154 = pneg %p77
        %p155 = pneg %p106
        %p156 = pneg %p103
        %s157 = sand.u32 %s93, 1
        %s158 = scalar_lea.sflag [#allocation3], %s157
        %s159 = sand.u32 %s93, 1
        %s160 = smul.addr %s159, 8
        %s161 = scalar_lea.vmem [#allocation2], %s160
        %p162 = scmp.lt.s32.totalorder %s17, 1
        %s163 = scalar_select %p162, %s17, 1
        %s164 = smul.addr %s163, 8
        %s165 = scalar_lea.vmem %s0, %s164
        %v167 = vld [vmem:[%s165] sm:$0xff]
        %v168 = vpack.c.bf16 %v167, %v167
        %v169 = vld [vmem:[%s1] sm:$0xf]
        %v170 = vld [vmem:[%s1 + $0x4] sm:$0xf]
        %v171 = vld [vmem:[%s1 + $0x8] sm:$0xf]
        %v172 = vld [vmem:[%s1 + $0xc] sm:$0xf]
        %v173 = vld [vmem:[%s1 + $0x10] sm:$0xf]
        %v174 = vld [vmem:[%s1 + $0x14] sm:$0xf]
        %v175 = vld [vmem:[%s1 + $0x18] sm:$0xf]
        %v176 = vld [vmem:[%s1 + $0x1c] sm:$0xf]
        %v177 = vld [vmem:[%s1 + $0x20] sm:$0xf]
        %v178 = vld [vmem:[%s1 + $0x24] sm:$0xf]
        %v179 = vld [vmem:[%s1 + $0x28] sm:$0xf]
        %v180 = vld [vmem:[%s1 + $0x2c] sm:$0xf]
        %v181 = vld [vmem:[%s1 + $0x30] sm:$0xf]
        %v182 = vld [vmem:[%s1 + $0x34] sm:$0xf]
        %v183 = vld [vmem:[%s1 + $0x38] sm:$0xf]
        %v184 = vld [vmem:[%s1 + $0x3c] sm:$0xf]
        %v189 = vunpack.c.l.b16 %v169
        %v190 = vunpack.c.l.b16 %v170
        %v191 = vunpack.c.l.b16 %v171
        %v192 = vunpack.c.l.b16 %v172
        %v193 = vpack.c.b16 %v190, %v189
        %v194 = vpack.c.b16 %v192, %v191
        %vm197 = vcmask 261120
        %v199 = vsel %vm197, %v168, 0
        %201 = vmatprep.subr.bf16.mxu0 0
        %202 = vmatpush1.bf16.msra.mxu0 %v193
        %203 = vmatprep.subr.bf16.mxu0 0
        %204 = vmatpush1.bf16.msra.mxu0 %v194
        %205 = vmatprep.subr.bf16.mxu0 0
        %206 = vmatpush1.bf16.msra.mxu0 0
        %207 = vmatprep.subr.bf16.mxu0 0
        %208 = vmatpush1.bf16.msra.mxu0 0
        %209 = vmatprep.subr.bf16.mxu0 0
        %210 = vmatpush1.bf16.msra.mxu0 0
        %211 = vmatprep.subr.bf16.mxu0 0
        %212 = vmatpush1.bf16.msra.mxu0 0
        %213 = vmatprep.subr.bf16.mxu0 0
        %214 = vmatpush1.bf16.msra.mxu0 0
        %215 = vmatprep.subr.bf16.mxu0 0
        %216 = vmatpush1.bf16.msra.mxu0 0
        %217 = vmatprep.subr.bf16.mxu0 0
        %218 = vmatpush1.bf16.msra.mxu0 0
        %219 = vmatprep.subr.bf16.mxu0 0
        %220 = vmatpush1.bf16.msra.mxu0 0
        %221 = vmatprep.subr.bf16.mxu0 0
        %222 = vmatpush1.bf16.msra.mxu0 0
        %223 = vmatprep.subr.bf16.mxu0 0
        %224 = vmatpush1.bf16.msra.mxu0 0
        %225 = vmatprep.subr.bf16.mxu0 0
        %226 = vmatpush1.bf16.msra.mxu0 0
        %227 = vmatprep.subr.bf16.mxu0 0
        %228 = vmatpush1.bf16.msra.mxu0 0
        %229 = vmatprep.subr.bf16.mxu0 0
        %230 = vmatpush1.bf16.msra.mxu0 0
        %231 = vmatprep.subr.bf16.mxu0 0
        %232 = vmatpush1.bf16.msra.mxu0 0
        %233 = vmatprep.mubr.bf16.mxu0 0
        %234 = vmatmul.mubr.bf16.gmra.mrb[0].mxu0 %v199
        %v235 = vpop.f32.mrb[0].mxu0
        %v236 = vadd.f32 0.0, %v235
        %v237 = vpop.f32.mrb[0].mxu0
        %v238 = vpop.f32.mrb[0].mxu0
        %v239 = vpop.f32.mrb[0].mxu0
        %240 = vdwg.mxu0
        %v245 = vunpack.c.l.b16 %v173
        %v246 = vunpack.c.l.b16 %v174
        %v247 = vunpack.c.l.b16 %v175
        %v248 = vunpack.c.l.b16 %v176
        %v249 = vpack.c.b16 %v246, %v245
        %v250 = vpack.c.b16 %v248, %v247
        %253 = vmatprep.subr.bf16.mxu0 0
        %254 = vmatpush1.bf16.msra.mxu0 %v249
        %255 = vmatprep.subr.bf16.mxu0 0
        %256 = vmatpush1.bf16.msra.mxu0 %v250
        %257 = vmatprep.subr.bf16.mxu0 0
        %258 = vmatpush1.bf16.msra.mxu0 0
        %259 = vmatprep.subr.bf16.mxu0 0
        %260 = vmatpush1.bf16.msra.mxu0 0
        %261 = vmatprep.subr.bf16.mxu0 0
        %262 = vmatpush1.bf16.msra.mxu0 0
        %263 = vmatprep.subr.bf16.mxu0 0
        %264 = vmatpush1.bf16.msra.mxu0 0
        %265 = vmatprep.subr.bf16.mxu0 0
        %266 = vmatpush1.bf16.msra.mxu0 0
        %267 = vmatprep.subr.bf16.mxu0 0
        %268 = vmatpush1.bf16.msra.mxu0 0
        %269 = vmatprep.subr.bf16.mxu0 0
        %270 = vmatpush1.bf16.msra.mxu0 0
        %271 = vmatprep.subr.bf16.mxu0 0
        %272 = vmatpush1.bf16.msra.mxu0 0
        %273 = vmatprep.subr.bf16.mxu0 0
        %274 = vmatpush1.bf16.msra.mxu0 0
        %275 = vmatprep.subr.bf16.mxu0 0
        %276 = vmatpush1.bf16.msra.mxu0 0
        %277 = vmatprep.subr.bf16.mxu0 0
        %278 = vmatpush1.bf16.msra.mxu0 0
        %279 = vmatprep.subr.bf16.mxu0 0
        %280 = vmatpush1.bf16.msra.mxu0 0
        %281 = vmatprep.subr.bf16.mxu0 0
        %282 = vmatpush1.bf16.msra.mxu0 0
        %283 = vmatprep.subr.bf16.mxu0 0
        %284 = vmatpush1.bf16.msra.mxu0 0
        %285 = vmatprep.mubr.bf16.mxu0 0
        %286 = vmatmul.mubr.bf16.gmra.mrb[0].mxu0 %v199
        %v287 = vpop.f32.mrb[0].mxu0
        %v288 = vadd.f32 0.0, %v287
        %v289 = vpop.f32.mrb[0].mxu0
        %v290 = vpop.f32.mrb[0].mxu0
        %v291 = vpop.f32.mrb[0].mxu0
        %292 = vdwg.mxu0
        %v297 = vunpack.c.l.b16 %v177
        %v298 = vunpack.c.l.b16 %v178
        %v299 = vunpack.c.l.b16 %v179
        %v300 = vunpack.c.l.b16 %v180
        %v301 = vpack.c.b16 %v298, %v297
        %v302 = vpack.c.b16 %v300, %v299
        %305 = vmatprep.subr.bf16.mxu0 0
        %306 = vmatpush1.bf16.msra.mxu0 %v301
        %307 = vmatprep.subr.bf16.mxu0 0
        %308 = vmatpush1.bf16.msra.mxu0 %v302
        %309 = vmatprep.subr.bf16.mxu0 0
        %310 = vmatpush1.bf16.msra.mxu0 0
        %311 = vmatprep.subr.bf16.mxu0 0
        %312 = vmatpush1.bf16.msra.mxu0 0
        %313 = vmatprep.subr.bf16.mxu0 0
        %314 = vmatpush1.bf16.msra.mxu0 0
        %315 = vmatprep.subr.bf16.mxu0 0
        %316 = vmatpush1.bf16.msra.mxu0 0
        %317 = vmatprep.subr.bf16.mxu0 0
        %318 = vmatpush1.bf16.msra.mxu0 0
        %319 = vmatprep.subr.bf16.mxu0 0
        %320 = vmatpush1.bf16.msra.mxu0 0
        %321 = vmatprep.subr.bf16.mxu0 0
        %322 = vmatpush1.bf16.msra.mxu0 0
        %323 = vmatprep.subr.bf16.mxu0 0
        %324 = vmatpush1.bf16.msra.mxu0 0
        %325 = vmatprep.subr.bf16.mxu0 0
        %326 = vmatpush1.bf16.msra.mxu0 0
        %327 = vmatprep.subr.bf16.mxu0 0
        %328 = vmatpush1.bf16.msra.mxu0 0
        %329 = vmatprep.subr.bf16.mxu0 0
        %330 = vmatpush1.bf16.msra.mxu0 0
        %331 = vmatprep.subr.bf16.mxu0 0
        %332 = vmatpush1.bf16.msra.mxu0 0
        %333 = vmatprep.subr.bf16.mxu0 0
        %334 = vmatpush1.bf16.msra.mxu0 0
        %335 = vmatprep.subr.bf16.mxu0 0
        %336 = vmatpush1.bf16.msra.mxu0 0
        %337 = vmatprep.mubr.bf16.mxu0 0
        %338 = vmatmul.mubr.bf16.gmra.mrb[0].mxu0 %v199
        %v339 = vpop.f32.mrb[0].mxu0
        %v340 = vadd.f32 0.0, %v339
        %v341 = vpop.f32.mrb[0].mxu0
        %v342 = vpop.f32.mrb[0].mxu0
        %v343 = vpop.f32.mrb[0].mxu0
        %344 = vdwg.mxu0
        %v349 = vunpack.c.l.b16 %v181
        %v350 = vunpack.c.l.b16 %v182
        %v351 = vunpack.c.l.b16 %v183
        %v352 = vunpack.c.l.b16 %v184
        %v353 = vpack.c.b16 %v350, %v349
        %v354 = vpack.c.b16 %v352, %v351
        %357 = vmatprep.subr.bf16.mxu0 0
        %358 = vmatpush1.bf16.msra.mxu0 %v353
        %359 = vmatprep.subr.bf16.mxu0 0
        %360 = vmatpush1.bf16.msra.mxu0 %v354
        %361 = vmatprep.subr.bf16.mxu0 0
        %362 = vmatpush1.bf16.msra.mxu0 0
        %363 = vmatprep.subr.bf16.mxu0 0
        %364 = vmatpush1.bf16.msra.mxu0 0
        %365 = vmatprep.subr.bf16.mxu0 0
        %366 = vmatpush1.bf16.msra.mxu0 0
        %367 = vmatprep.subr.bf16.mxu0 0
        %368 = vmatpush1.bf16.msra.mxu0 0
        %369 = vmatprep.subr.bf16.mxu0 0
        %370 = vmatpush1.bf16.msra.mxu0 0
        %371 = vmatprep.subr.bf16.mxu0 0
        %372 = vmatpush1.bf16.msra.mxu0 0
        %373 = vmatprep.subr.bf16.mxu0 0
        %374 = vmatpush1.bf16.msra.mxu0 0
        %375 = vmatprep.subr.bf16.mxu0 0
        %376 = vmatpush1.bf16.msra.mxu0 0
        %377 = vmatprep.subr.bf16.mxu0 0
        %378 = vmatpush1.bf16.msra.mxu0 0
        %379 = vmatprep.subr.bf16.mxu0 0
        %380 = vmatpush1.bf16.msra.mxu0 0
        %381 = vmatprep.subr.bf16.mxu0 0
        %382 = vmatpush1.bf16.msra.mxu0 0
        %383 = vmatprep.subr.bf16.mxu0 0
        %384 = vmatpush1.bf16.msra.mxu0 0
        %385 = vmatprep.subr.bf16.mxu0 0
        %386 = vmatpush1.bf16.msra.mxu0 0
        %387 = vmatprep.subr.bf16.mxu0 0
        %388 = vmatpush1.bf16.msra.mxu0 0
        %389 = vmatprep.mubr.bf16.mxu0 0
        %390 = vmatmul.mubr.bf16.gmra.mrb[0].mxu0 %v199
        %v391 = vpop.f32.mrb[0].mxu0
        %v392 = vadd.f32 0.0, %v391
        %v393 = vpop.f32.mrb[0].mxu0
        %v394 = vpop.f32.mrb[0].mxu0
        %v395 = vpop.f32.mrb[0].mxu0
        %396 = vdwg.mxu0
        %v397 = vpack.c.bf16 %v236, %v236
        %v398 = vpack.c.bf16 %v288, %v288
        %v399 = vpack.c.bf16 %v340, %v340
        %v400 = vpack.c.bf16 %v392, %v392
        %402 = vrot.lane.b32.xlu0 %v397, 120
        %v403 = vpop.permute.xlu0 %402
        %vm404 = vcmask 64512
        %v406 = vsel %vm404, %v397, 0
        %v409 = vsel %vm404, %v403, 0
        %411 = vmatprep.subr.bf16.mxu0 0
        %412 = vmatpush1.bf16.xpose.msra.mxu0 %v409
        %413 = vmatprep.subr.bf16.mxu0 0
        %414 = vmatpush1.bf16.xpose.msra.mxu0 0
        %415 = vmatprep.subr.bf16.mxu0 0
        %416 = vmatpush1.bf16.xpose.msra.mxu0 0
        %417 = vmatprep.subr.bf16.mxu0 0
        %418 = vmatpush1.bf16.xpose.msra.mxu0 0
        %419 = vmatprep.subr.bf16.mxu0 0
        %420 = vmatpush1.bf16.xpose.msra.mxu0 0
        %421 = vmatprep.subr.bf16.mxu0 0
        %422 = vmatpush1.bf16.xpose.msra.mxu0 0
        %423 = vmatprep.subr.bf16.mxu0 0
        %424 = vmatpush1.bf16.xpose.msra.mxu0 0
        %425 = vmatprep.subr.bf16.mxu0 0
        %426 = vmatpush1.bf16.xpose.msra.mxu0 0
        %427 = vmatprep.subr.bf16.mxu0 0
        %428 = vmatpush1.bf16.xpose.msra.mxu0 0
        %429 = vmatprep.subr.bf16.mxu0 0
        %430 = vmatpush1.bf16.xpose.msra.mxu0 0
        %431 = vmatprep.subr.bf16.mxu0 0
        %432 = vmatpush1.bf16.xpose.msra.mxu0 0
        %433 = vmatprep.subr.bf16.mxu0 0
        %434 = vmatpush1.bf16.xpose.msra.mxu0 0
        %435 = vmatprep.subr.bf16.mxu0 0
        %436 = vmatpush1.bf16.xpose.msra.mxu0 0
        %437 = vmatprep.subr.bf16.mxu0 0
        %438 = vmatpush1.bf16.xpose.msra.mxu0 0
        %439 = vmatprep.subr.bf16.mxu0 0
        %440 = vmatpush1.bf16.xpose.msra.mxu0 0
        %441 = vmatprep.subr.bf16.mxu0 0
        %442 = vmatpush1.bf16.xpose.msra.mxu0 0
        %443 = vmatprep.mubr.bf16.mxu0 0
        %444 = vmatmul.mubr.bf16.gmra.mrb[0].mxu0 %v406
        %v445 = vpop.f32.mrb[0].mxu0
        %v446 = vadd.f32 0.0, %v445
        %v447 = vpop.f32.mrb[0].mxu0
        %v448 = vpop.f32.mrb[0].mxu0
        %v449 = vpop.f32.mrb[0].mxu0
        %450 = vdwg.mxu0
        %452 = vrot.lane.b32.xlu0 %v398, 120
        %v453 = vpop.permute.xlu0 %452
        %v455 = vsel %vm404, %v398, 0
        %v458 = vsel %vm404, %v453, 0
        %460 = vmatprep.subr.bf16.mxu0 0
        %461 = vmatpush1.bf16.xpose.msra.mxu0 %v458
        %462 = vmatprep.subr.bf16.mxu0 0
        %463 = vmatpush1.bf16.xpose.msra.mxu0 0
        %464 = vmatprep.subr.bf16.mxu0 0
        %465 = vmatpush1.bf16.xpose.msra.mxu0 0
        %466 = vmatprep.subr.bf16.mxu0 0
        %467 = vmatpush1.bf16.xpose.msra.mxu0 0
        %468 = vmatprep.subr.bf16.mxu0 0
        %469 = vmatpush1.bf16.xpose.msra.mxu0 0
        %470 = vmatprep.subr.bf16.mxu0 0
        %471 = vmatpush1.bf16.xpose.msra.mxu0 0
        %472 = vmatprep.subr.bf16.mxu0 0
        %473 = vmatpush1.bf16.xpose.msra.mxu0 0
        %474 = vmatprep.subr.bf16.mxu0 0
        %475 = vmatpush1.bf16.xpose.msra.mxu0 0
        %476 = vmatprep.subr.bf16.mxu0 0
        %477 = vmatpush1.bf16.xpose.msra.mxu0 0
        %478 = vmatprep.subr.bf16.mxu0 0
        %479 = vmatpush1.bf16.xpose.msra.mxu0 0
        %480 = vmatprep.subr.bf16.mxu0 0
        %481 = vmatpush1.bf16.xpose.msra.mxu0 0
        %482 = vmatprep.subr.bf16.mxu0 0
        %483 = vmatpush1.bf16.xpose.msra.mxu0 0
        %484 = vmatprep.subr.bf16.mxu0 0
        %485 = vmatpush1.bf16.xpose.msra.mxu0 0
        %486 = vmatprep.subr.bf16.mxu0 0
        %487 = vmatpush1.bf16.xpose.msra.mxu0 0
        %488 = vmatprep.subr.bf16.mxu0 0
        %489 = vmatpush1.bf16.xpose.msra.mxu0 0
        %490 = vmatprep.subr.bf16.mxu0 0
        %491 = vmatpush1.bf16.xpose.msra.mxu0 0
        %492 = vmatprep.mubr.bf16.mxu0 0
        %493 = vmatmul.mubr.bf16.gmra.mrb[0].mxu0 %v455
        %v494 = vpop.f32.mrb[0].mxu0
        %v495 = vadd.f32 0.0, %v494
        %v496 = vpop.f32.mrb[0].mxu0
        %v497 = vpop.f32.mrb[0].mxu0
        %v498 = vpop.f32.mrb[0].mxu0
        %499 = vdwg.mxu0
        %501 = vrot.lane.b32.xlu0 %v399, 120
        %v502 = vpop.permute.xlu0 %501
        %v504 = vsel %vm404, %v399, 0
        %v507 = vsel %vm404, %v502, 0
        %509 = vmatprep.subr.bf16.mxu0 0
        %510 = vmatpush1.bf16.xpose.msra.mxu0 %v507
        %511 = vmatprep.subr.bf16.mxu0 0
        %512 = vmatpush1.bf16.xpose.msra.mxu0 0
        %513 = vmatprep.subr.bf16.mxu0 0
        %514 = vmatpush1.bf16.xpose.msra.mxu0 0
        %515 = vmatprep.subr.bf16.mxu0 0
        %516 = vmatpush1.bf16.xpose.msra.mxu0 0
        %517 = vmatprep.subr.bf16.mxu0 0
        %518 = vmatpush1.bf16.xpose.msra.mxu0 0
        %519 = vmatprep.subr.bf16.mxu0 0
        %520 = vmatpush1.bf16.xpose.msra.mxu0 0
        %521 = vmatprep.subr.bf16.mxu0 0
        %522 = vmatpush1.bf16.xpose.msra.mxu0 0
        %523 = vmatprep.subr.bf16.mxu0 0
        %524 = vmatpush1.bf16.xpose.msra.mxu0 0
        %525 = vmatprep.subr.bf16.mxu0 0
        %526 = vmatpush1.bf16.xpose.msra.mxu0 0
        %527 = vmatprep.subr.bf16.mxu0 0
        %528 = vmatpush1.bf16.xpose.msra.mxu0 0
        %529 = vmatprep.subr.bf16.mxu0 0
        %530 = vmatpush1.bf16.xpose.msra.mxu0 0
        %531 = vmatprep.subr.bf16.mxu0 0
        %532 = vmatpush1.bf16.xpose.msra.mxu0 0
        %533 = vmatprep.subr.bf16.mxu0 0
        %534 = vmatpush1.bf16.xpose.msra.mxu0 0
        %535 = vmatprep.subr.bf16.mxu0 0
        %536 = vmatpush1.bf16.xpose.msra.mxu0 0
        %537 = vmatprep.subr.bf16.mxu0 0
        %538 = vmatpush1.bf16.xpose.msra.mxu0 0
        %539 = vmatprep.subr.bf16.mxu0 0
        %540 = vmatpush1.bf16.xpose.msra.mxu0 0
        %541 = vmatprep.mubr.bf16.mxu0 0
        %542 = vmatmul.mubr.bf16.gmra.mrb[0].mxu0 %v504
        %v543 = vpop.f32.mrb[0].mxu0
        %v544 = vadd.f32 0.0, %v543
        %v545 = vpop.f32.mrb[0].mxu0
        %v546 = vpop.f32.mrb[0].mxu0
        %v547 = vpop.f32.mrb[0].mxu0
        %548 = vdwg.mxu0
        %550 = vrot.lane.b32.xlu0 %v400, 120
        %v551 = vpop.permute.xlu0 %550
        %v553 = vsel %vm404, %v400, 0
        %v556 = vsel %vm404, %v551, 0
        %558 = vmatprep.subr.bf16.mxu0 0
        %559 = vmatpush1.bf16.xpose.msra.mxu0 %v556
        %560 = vmatprep.subr.bf16.mxu0 0
        %561 = vmatpush1.bf16.xpose.msra.mxu0 0
        %562 = vmatprep.subr.bf16.mxu0 0
        %563 = vmatpush1.bf16.xpose.msra.mxu0 0
        %564 = vmatprep.subr.bf16.mxu0 0
        %565 = vmatpush1.bf16.xpose.msra.mxu0 0
        %566 = vmatprep.subr.bf16.mxu0 0
        %567 = vmatpush1.bf16.xpose.msra.mxu0 0
        %568 = vmatprep.subr.bf16.mxu0 0
        %569 = vmatpush1.bf16.xpose.msra.mxu0 0
        %570 = vmatprep.subr.bf16.mxu0 0
        %571 = vmatpush1.bf16.xpose.msra.mxu0 0
        %572 = vmatprep.subr.bf16.mxu0 0
        %573 = vmatpush1.bf16.xpose.msra.mxu0 0
        %574 = vmatprep.subr.bf16.mxu0 0
        %575 = vmatpush1.bf16.xpose.msra.mxu0 0
        %576 = vmatprep.subr.bf16.mxu0 0
        %577 = vmatpush1.bf16.xpose.msra.mxu0 0
        %578 = vmatprep.subr.bf16.mxu0 0
        %579 = vmatpush1.bf16.xpose.msra.mxu0 0
        %580 = vmatprep.subr.bf16.mxu0 0
        %581 = vmatpush1.bf16.xpose.msra.mxu0 0
        %582 = vmatprep.subr.bf16.mxu0 0
        %583 = vmatpush1.bf16.xpose.msra.mxu0 0
        %584 = vmatprep.subr.bf16.mxu0 0
        %585 = vmatpush1.bf16.xpose.msra.mxu0 0
        %586 = vmatprep.subr.bf16.mxu0 0
        %587 = vmatpush1.bf16.xpose.msra.mxu0 0
        %588 = vmatprep.subr.bf16.mxu0 0
        %589 = vmatpush1.bf16.xpose.msra.mxu0 0
        %590 = vmatprep.mubr.bf16.mxu0 0
        %591 = vmatmul.mubr.bf16.gmra.mrb[0].mxu0 %v553
        %v592 = vpop.f32.mrb[0].mxu0
        %v593 = vadd.f32 0.0, %v592
        %v594 = vpop.f32.mrb[0].mxu0
        %v595 = vpop.f32.mrb[0].mxu0
        %v596 = vpop.f32.mrb[0].mxu0
        %597 = vdwg.mxu0
        %v598 = vsel %vm404, %v446, -inf
        %599 = vmax.xlane.f32.xlu0 %v598
        %v600 = vpop.xlane.xlu0 %599
        %v601 = vsel %vm404, %v495, -inf
        %602 = vmax.xlane.f32.xlu0 %v601
        %v603 = vpop.xlane.xlu0 %602
        %v604 = vsel %vm404, %v544, -inf
        %605 = vmax.xlane.f32.xlu0 %v604
        %v606 = vpop.xlane.xlu0 %605
        %v607 = vsel %vm404, %v593, -inf
        %608 = vmax.xlane.f32.xlu0 %v607
        %v609 = vpop.xlane.xlu0 %608
        %v610 = vsub.f32 %v446, %v600
        %v611 = vsub.f32 %v495, %v603
        %v612 = vsub.f32 %v544, %v606
        %v613 = vsub.f32 %v593, %v609
        %v614 = vmul.f32 %v610, 1.442695
        %v615 = vpow.pop %v614
        %v616 = vmul.f32 %v611, 1.442695
        %v617 = vpow.pop %v616
        %v618 = vmul.f32 %v612, 1.442695
        %v619 = vpow.pop %v618
        %v620 = vmul.f32 %v613, 1.442695
        %v621 = vpow.pop %v620
        %v622 = vsel %vm404, %v615, 0.0
        %623 = vadd.xlane.f32.xlu0 %v622
        %v624 = vpop.xlane.xlu0 %623
        %v625 = vsel %vm404, %v617, 0.0
        %626 = vadd.xlane.f32.xlu0 %v625
        %v627 = vpop.xlane.xlu0 %626
        %v628 = vsel %vm404, %v619, 0.0
        %629 = vadd.xlane.f32.xlu0 %v628
        %v630 = vpop.xlane.xlu0 %629
        %v631 = vsel %vm404, %v621, 0.0
        %632 = vadd.xlane.f32.xlu0 %v631
        %v633 = vpop.xlane.xlu0 %632
        %v634 = vrcp.pop %v624
        %v635 = vrcp.pop %v627
        %v636 = vrcp.pop %v630
        %v637 = vrcp.pop %v633
        %v638 = vmul.f32 %v615, %v634
        %v639 = vmul.f32 %v617, %v635
        %v640 = vmul.f32 %v619, %v636
        %v641 = vmul.f32 %v621, %v637
        %v642 = vpack.c.bf16 %v638, %v638
        %v643 = vpack.c.bf16 %v639, %v639
        %v644 = vpack.c.bf16 %v640, %v640
        %v645 = vpack.c.bf16 %v641, %v641
        %646 = vrot.lane.b32.xlu0 %v397, 112
        %v647 = vpop.permute.xlu0 %646
        %v649 = vsel %vm404, %v642, 0
        %vm651 = vcmask 1043456
        %v653 = vsel %vm651, %v647, 0
        %655 = vmatprep.subr.bf16.mxu0 0
        %656 = vmatpush1.bf16.msra.mxu0 %v653
        %657 = vmatprep.subr.bf16.mxu0 0
        %658 = vmatpush1.bf16.msra.mxu0 0
        %659 = vmatprep.subr.bf16.mxu0 0
        %660 = vmatpush1.bf16.msra.mxu0 0
        %661 = vmatprep.subr.bf16.mxu0 0
        %662 = vmatpush1.bf16.msra.mxu0 0
        %663 = vmatprep.subr.bf16.mxu0 0
        %664 = vmatpush1.bf16.msra.mxu0 0
        %665 = vmatprep.subr.bf16.mxu0 0
        %666 = vmatpush1.bf16.msra.mxu0 0
        %667 = vmatprep.subr.bf16.mxu0 0
        %668 = vmatpush1.bf16.msra.mxu0 0
        %669 = vmatprep.subr.bf16.mxu0 0
        %670 = vmatpush1.bf16.msra.mxu0 0
        %671 = vmatprep.subr.bf16.mxu0 0
        %672 = vmatpush1.bf16.msra.mxu0 0
        %673 = vmatprep.subr.bf16.mxu0 0
        %674 = vmatpush1.bf16.msra.mxu0 0
        %675 = vmatprep.subr.bf16.mxu0 0
        %676 = vmatpush1.bf16.msra.mxu0 0
        %677 = vmatprep.subr.bf16.mxu0 0
        %678 = vmatpush1.bf16.msra.mxu0 0
        %679 = vmatprep.subr.bf16.mxu0 0
        %680 = vmatpush1.bf16.msra.mxu0 0
        %681 = vmatprep.subr.bf16.mxu0 0
        %682 = vmatpush1.bf16.msra.mxu0 0
        %683 = vmatprep.subr.bf16.mxu0 0
        %684 = vmatpush1.bf16.msra.mxu0 0
        %685 = vmatprep.subr.bf16.mxu0 0
        %686 = vmatpush1.bf16.msra.mxu0 0
        %687 = vmatprep.mubr.bf16.mxu0 0
        %688 = vmatmul.mubr.bf16.gmra.mrb[0].mxu0 %v649
        %v689 = vpop.f32.mrb[0].mxu0
        %v690 = vadd.f32 0.0, %v689
        %v691 = vpop.f32.mrb[0].mxu0
        %v692 = vpop.f32.mrb[0].mxu0
        %v693 = vpop.f32.mrb[0].mxu0
        %694 = vdwg.mxu0
        %695 = vrot.lane.b32.xlu0 %v398, 112
        %v696 = vpop.permute.xlu0 %695
        %v698 = vsel %vm404, %v643, 0
        %v701 = vsel %vm651, %v696, 0
        %703 = vmatprep.subr.bf16.mxu0 0
        %704 = vmatpush1.bf16.msra.mxu0 %v701
        %705 = vmatprep.subr.bf16.mxu0 0
        %706 = vmatpush1.bf16.msra.mxu0 0
        %707 = vmatprep.subr.bf16.mxu0 0
        %708 = vmatpush1.bf16.msra.mxu0 0
        %709 = vmatprep.subr.bf16.mxu0 0
        %710 = vmatpush1.bf16.msra.mxu0 0
        %711 = vmatprep.subr.bf16.mxu0 0
        %712 = vmatpush1.bf16.msra.mxu0 0
        %713 = vmatprep.subr.bf16.mxu0 0
        %714 = vmatpush1.bf16.msra.mxu0 0
        %715 = vmatprep.subr.bf16.mxu0 0
        %716 = vmatpush1.bf16.msra.mxu0 0
        %717 = vmatprep.subr.bf16.mxu0 0
        %718 = vmatpush1.bf16.msra.mxu0 0
        %719 = vmatprep.subr.bf16.mxu0 0
        %720 = vmatpush1.bf16.msra.mxu0 0
        %721 = vmatprep.subr.bf16.mxu0 0
        %722 = vmatpush1.bf16.msra.mxu0 0
        %723 = vmatprep.subr.bf16.mxu0 0
        %724 = vmatpush1.bf16.msra.mxu0 0
        %725 = vmatprep.subr.bf16.mxu0 0
        %726 = vmatpush1.bf16.msra.mxu0 0
        %727 = vmatprep.subr.bf16.mxu0 0
        %728 = vmatpush1.bf16.msra.mxu0 0
        %729 = vmatprep.subr.bf16.mxu0 0
        %730 = vmatpush1.bf16.msra.mxu0 0
        %731 = vmatprep.subr.bf16.mxu0 0
        %732 = vmatpush1.bf16.msra.mxu0 0
        %733 = vmatprep.subr.bf16.mxu0 0
        %734 = vmatpush1.bf16.msra.mxu0 0
        %735 = vmatprep.mubr.bf16.mxu0 0
        %736 = vmatmul.mubr.bf16.gmra.mrb[0].mxu0 %v698
        %v737 = vpop.f32.mrb[0].mxu0
        %v738 = vadd.f32 0.0, %v737
        %v739 = vpop.f32.mrb[0].mxu0
        %v740 = vpop.f32.mrb[0].mxu0
        %v741 = vpop.f32.mrb[0].mxu0
        %742 = vdwg.mxu0
        %743 = vrot.lane.b32.xlu0 %v399, 112
        %v744 = vpop.permute.xlu0 %743
        %v746 = vsel %vm404, %v644, 0
        %v749 = vsel %vm651, %v744, 0
        %751 = vmatprep.subr.bf16.mxu0 0
        %752 = vmatpush1.bf16.msra.mxu0 %v749
        %753 = vmatprep.subr.bf16.mxu0 0
        %754 = vmatpush1.bf16.msra.mxu0 0
        %755 = vmatprep.subr.bf16.mxu0 0
        %756 = vmatpush1.bf16.msra.mxu0 0
        %757 = vmatprep.subr.bf16.mxu0 0
        %758 = vmatpush1.bf16.msra.mxu0 0
        %759 = vmatprep.subr.bf16.mxu0 0
        %760 = vmatpush1.bf16.msra.mxu0 0
        %761 = vmatprep.subr.bf16.mxu0 0
        %762 = vmatpush1.bf16.msra.mxu0 0
        %763 = vmatprep.subr.bf16.mxu0 0
        %764 = vmatpush1.bf16.msra.mxu0 0
        %765 = vmatprep.subr.bf16.mxu0 0
        %766 = vmatpush1.bf16.msra.mxu0 0
        %767 = vmatprep.subr.bf16.mxu0 0
        %768 = vmatpush1.bf16.msra.mxu0 0
        %769 = vmatprep.subr.bf16.mxu0 0
        %770 = vmatpush1.bf16.msra.mxu0 0
        %771 = vmatprep.subr.bf16.mxu0 0
        %772 = vmatpush1.bf16.msra.mxu0 0
        %773 = vmatprep.subr.bf16.mxu0 0
        %774 = vmatpush1.bf16.msra.mxu0 0
        %775 = vmatprep.subr.bf16.mxu0 0
        %776 = vmatpush1.bf16.msra.mxu0 0
        %777 = vmatprep.subr.bf16.mxu0 0
        %778 = vmatpush1.bf16.msra.mxu0 0
        %779 = vmatprep.subr.bf16.mxu0 0
        %780 = vmatpush1.bf16.msra.mxu0 0
        %781 = vmatprep.subr.bf16.mxu0 0
        %782 = vmatpush1.bf16.msra.mxu0 0
        %783 = vmatprep.mubr.bf16.mxu0 0
        %784 = vmatmul.mubr.bf16.gmra.mrb[0].mxu0 %v746
        %v785 = vpop.f32.mrb[0].mxu0
        %v786 = vadd.f32 0.0, %v785
        %v787 = vpop.f32.mrb[0].mxu0
        %v788 = vpop.f32.mrb[0].mxu0
        %v789 = vpop.f32.mrb[0].mxu0
        %790 = vdwg.mxu0
        %791 = vrot.lane.b32.xlu0 %v400, 112
        %v792 = vpop.permute.xlu0 %791
        %v794 = vsel %vm404, %v645, 0
        %v797 = vsel %vm651, %v792, 0
        %799 = vmatprep.subr.bf16.mxu0 0
        %800 = vmatpush1.bf16.msra.mxu0 %v797
        %801 = vmatprep.subr.bf16.mxu0 0
        %802 = vmatpush1.bf16.msra.mxu0 0
        %803 = vmatprep.subr.bf16.mxu0 0
        %804 = vmatpush1.bf16.msra.mxu0 0
        %805 = vmatprep.subr.bf16.mxu0 0
        %806 = vmatpush1.bf16.msra.mxu0 0
        %807 = vmatprep.subr.bf16.mxu0 0
        %808 = vmatpush1.bf16.msra.mxu0 0
        %809 = vmatprep.subr.bf16.mxu0 0
        %810 = vmatpush1.bf16.msra.mxu0 0
        %811 = vmatprep.subr.bf16.mxu0 0
        %812 = vmatpush1.bf16.msra.mxu0 0
        %813 = vmatprep.subr.bf16.mxu0 0
        %814 = vmatpush1.bf16.msra.mxu0 0
        %815 = vmatprep.subr.bf16.mxu0 0
        %816 = vmatpush1.bf16.msra.mxu0 0
        %817 = vmatprep.subr.bf16.mxu0 0
        %818 = vmatpush1.bf16.msra.mxu0 0
        %819 = vmatprep.subr.bf16.mxu0 0
        %820 = vmatpush1.bf16.msra.mxu0 0
        %821 = vmatprep.subr.bf16.mxu0 0
        %822 = vmatpush1.bf16.msra.mxu0 0
        %823 = vmatprep.subr.bf16.mxu0 0
        %824 = vmatpush1.bf16.msra.mxu0 0
        %825 = vmatprep.subr.bf16.mxu0 0
        %826 = vmatpush1.bf16.msra.mxu0 0
        %827 = vmatprep.subr.bf16.mxu0 0
        %828 = vmatpush1.bf16.msra.mxu0 0
        %829 = vmatprep.subr.bf16.mxu0 0
        %830 = vmatpush1.bf16.msra.mxu0 0
        %831 = vmatprep.mubr.bf16.mxu0 0
        %832 = vmatmul.mubr.bf16.gmra.mrb[0].mxu0 %v794
        %v833 = vpop.f32.mrb[0].mxu0
        %v834 = vadd.f32 0.0, %v833
        %v835 = vpop.f32.mrb[0].mxu0
        %v836 = vpop.f32.mrb[0].mxu0
        %v837 = vpop.f32.mrb[0].mxu0
        %838 = vdwg.mxu0
        %v839 = vpack.c.bf16 %v690, %v690
        %v840 = vpack.c.bf16 %v738, %v738
        %v841 = vpack.c.bf16 %v786, %v786
        %v842 = vpack.c.bf16 %v834, %v834
        %v843 = vld [vmem:[%s2] sm:$0xf]
        %v844 = vld [vmem:[%s2 + $0x4] sm:$0xf]
        %v845 = vld [vmem:[%s2 + $0x8] sm:$0xf]
        %v846 = vld [vmem:[%s2 + $0xc] sm:$0xf]
        %v848 = vsel %vm404, %v839, 0
        %v851 = vsel %vm651, %v843, 0
        %853 = vmatprep.subr.bf16.mxu0 0
        %854 = vmatpush1.bf16.msra.mxu0 %v851
        %855 = vmatprep.subr.bf16.mxu0 0
        %856 = vmatpush1.bf16.msra.mxu0 0
        %857 = vmatprep.subr.bf16.mxu0 0
        %858 = vmatpush1.bf16.msra.mxu0 0
        %859 = vmatprep.subr.bf16.mxu0 0
        %860 = vmatpush1.bf16.msra.mxu0 0
        %861 = vmatprep.subr.bf16.mxu0 0
        %862 = vmatpush1.bf16.msra.mxu0 0
        %863 = vmatprep.subr.bf16.mxu0 0
        %864 = vmatpush1.bf16.msra.mxu0 0
        %865 = vmatprep.subr.bf16.mxu0 0
        %866 = vmatpush1.bf16.msra.mxu0 0
        %867 = vmatprep.subr.bf16.mxu0 0
        %868 = vmatpush1.bf16.msra.mxu0 0
        %869 = vmatprep.subr.bf16.mxu0 0
        %870 = vmatpush1.bf16.msra.mxu0 0
        %871 = vmatprep.subr.bf16.mxu0 0
        %872 = vmatpush1.bf16.msra.mxu0 0
        %873 = vmatprep.subr.bf16.mxu0 0
        %874 = vmatpush1.bf16.msra.mxu0 0
        %875 = vmatprep.subr.bf16.mxu0 0
        %876 = vmatpush1.bf16.msra.mxu0 0
        %877 = vmatprep.subr.bf16.mxu0 0
        %878 = vmatpush1.bf16.msra.mxu0 0
        %879 = vmatprep.subr.bf16.mxu0 0
        %880 = vmatpush1.bf16.msra.mxu0 0
        %881 = vmatprep.subr.bf16.mxu0 0
        %882 = vmatpush1.bf16.msra.mxu0 0
        %883 = vmatprep.subr.bf16.mxu0 0
        %884 = vmatpush1.bf16.msra.mxu0 0
        %885 = vmatprep.mubr.bf16.mxu0 0
        %886 = vmatmul.mubr.bf16.gmra.mrb[0].mxu0 %v848
        %v887 = vpop.f32.mrb[0].mxu0
        %v888 = vadd.f32 0.0, %v887
        %v889 = vpop.f32.mrb[0].mxu0
        %v890 = vpop.f32.mrb[0].mxu0
        %v891 = vpop.f32.mrb[0].mxu0
        %892 = vdwg.mxu0
        %v894 = vsel %vm404, %v840, 0
        %v897 = vsel %vm651, %v844, 0
        %899 = vmatprep.subr.bf16.mxu0 0
        %900 = vmatpush1.bf16.msra.mxu0 %v897
        %901 = vmatprep.subr.bf16.mxu0 0
        %902 = vmatpush1.bf16.msra.mxu0 0
        %903 = vmatprep.subr.bf16.mxu0 0
        %904 = vmatpush1.bf16.msra.mxu0 0
        %905 = vmatprep.subr.bf16.mxu0 0
        %906 = vmatpush1.bf16.msra.mxu0 0
        %907 = vmatprep.subr.bf16.mxu0 0
        %908 = vmatpush1.bf16.msra.mxu0 0
        %909 = vmatprep.subr.bf16.mxu0 0
        %910 = vmatpush1.bf16.msra.mxu0 0
        %911 = vmatprep.subr.bf16.mxu0 0
        %912 = vmatpush1.bf16.msra.mxu0 0
        %913 = vmatprep.subr.bf16.mxu0 0
        %914 = vmatpush1.bf16.msra.mxu0 0
        %915 = vmatprep.subr.bf16.mxu0 0
        %916 = vmatpush1.bf16.msra.mxu0 0
        %917 = vmatprep.subr.bf16.mxu0 0
        %918 = vmatpush1.bf16.msra.mxu0 0
        %919 = vmatprep.subr.bf16.mxu0 0
        %920 = vmatpush1.bf16.msra.mxu0 0
        %921 = vmatprep.subr.bf16.mxu0 0
        %922 = vmatpush1.bf16.msra.mxu0 0
        %923 = vmatprep.subr.bf16.mxu0 0
        %924 = vmatpush1.bf16.msra.mxu0 0
        %925 = vmatprep.subr.bf16.mxu0 0
        %926 = vmatpush1.bf16.msra.mxu0 0
        %927 = vmatprep.subr.bf16.mxu0 0
        %928 = vmatpush1.bf16.msra.mxu0 0
        %929 = vmatprep.subr.bf16.mxu0 0
        %930 = vmatpush1.bf16.msra.mxu0 0
        %931 = vmatprep.mubr.bf16.mxu0 0
        %932 = vmatmul.mubr.bf16.gmra.mrb[0].mxu0 %v894
        %v933 = vpop.f32.mrb[0].mxu0
        %v934 = vadd.f32 0.0, %v933
        %v935 = vpop.f32.mrb[0].mxu0
        %v936 = vpop.f32.mrb[0].mxu0
        %v937 = vpop.f32.mrb[0].mxu0
        %938 = vdwg.mxu0
        %v940 = vsel %vm404, %v841, 0
        %v943 = vsel %vm651, %v845, 0
        %945 = vmatprep.subr.bf16.mxu0 0
        %946 = vmatpush1.bf16.msra.mxu0 %v943
        %947 = vmatprep.subr.bf16.mxu0 0
        %948 = vmatpush1.bf16.msra.mxu0 0
        %949 = vmatprep.subr.bf16.mxu0 0
        %950 = vmatpush1.bf16.msra.mxu0 0
        %951 = vmatprep.subr.bf16.mxu0 0
        %952 = vmatpush1.bf16.msra.mxu0 0
        %953 = vmatprep.subr.bf16.mxu0 0
        %954 = vmatpush1.bf16.msra.mxu0 0
        %955 = vmatprep.subr.bf16.mxu0 0
        %956 = vmatpush1.bf16.msra.mxu0 0
        %957 = vmatprep.subr.bf16.mxu0 0
        %958 = vmatpush1.bf16.msra.mxu0 0
        %959 = vmatprep.subr.bf16.mxu0 0
        %960 = vmatpush1.bf16.msra.mxu0 0
        %961 = vmatprep.subr.bf16.mxu0 0
        %962 = vmatpush1.bf16.msra.mxu0 0
        %963 = vmatprep.subr.bf16.mxu0 0
        %964 = vmatpush1.bf16.msra.mxu0 0
        %965 = vmatprep.subr.bf16.mxu0 0
        %966 = vmatpush1.bf16.msra.mxu0 0
        %967 = vmatprep.subr.bf16.mxu0 0
        %968 = vmatpush1.bf16.msra.mxu0 0
        %969 = vmatprep.subr.bf16.mxu0 0
        %970 = vmatpush1.bf16.msra.mxu0 0
        %971 = vmatprep.subr.bf16.mxu0 0
        %972 = vmatpush1.bf16.msra.mxu0 0
        %973 = vmatprep.subr.bf16.mxu0 0
        %974 = vmatpush1.bf16.msra.mxu0 0
        %975 = vmatprep.subr.bf16.mxu0 0
        %976 = vmatpush1.bf16.msra.mxu0 0
        %977 = vmatprep.mubr.bf16.mxu0 0
        %978 = vmatmul.mubr.bf16.gmra.mrb[0].mxu0 %v940
        %v979 = vpop.f32.mrb[0].mxu0
        %v980 = vadd.f32 0.0, %v979
        %v981 = vpop.f32.mrb[0].mxu0
        %v982 = vpop.f32.mrb[0].mxu0
        %v983 = vpop.f32.mrb[0].mxu0
        %984 = vdwg.mxu0
        %v986 = vsel %vm404, %v842, 0
        %v989 = vsel %vm651, %v846, 0
        %991 = vmatprep.subr.bf16.mxu0 0
        %992 = vmatpush1.bf16.msra.mxu0 %v989
        %993 = vmatprep.subr.bf16.mxu0 0
        %994 = vmatpush1.bf16.msra.mxu0 0
        %995 = vmatprep.subr.bf16.mxu0 0
        %996 = vmatpush1.bf16.msra.mxu0 0
        %997 = vmatprep.subr.bf16.mxu0 0
        %998 = vmatpush1.bf16.msra.mxu0 0
        %999 = vmatprep.subr.bf16.mxu0 0
        %1000 = vmatpush1.bf16.msra.mxu0 0
        %1001 = vmatprep.subr.bf16.mxu0 0
        %1002 = vmatpush1.bf16.msra.mxu0 0
        %1003 = vmatprep.subr.bf16.mxu0 0
        %1004 = vmatpush1.bf16.msra.mxu0 0
        %1005 = vmatprep.subr.bf16.mxu0 0
        %1006 = vmatpush1.bf16.msra.mxu0 0
        %1007 = vmatprep.subr.bf16.mxu0 0
        %1008 = vmatpush1.bf16.msra.mxu0 0
        %1009 = vmatprep.subr.bf16.mxu0 0
        %1010 = vmatpush1.bf16.msra.mxu0 0
        %1011 = vmatprep.subr.bf16.mxu0 0
        %1012 = vmatpush1.bf16.msra.mxu0 0
        %1013 = vmatprep.subr.bf16.mxu0 0
        %1014 = vmatpush1.bf16.msra.mxu0 0
        %1015 = vmatprep.subr.bf16.mxu0 0
        %1016 = vmatpush1.bf16.msra.mxu0 0
        %1017 = vmatprep.subr.bf16.mxu0 0
        %1018 = vmatpush1.bf16.msra.mxu0 0
        %1019 = vmatprep.subr.bf16.mxu0 0
        %1020 = vmatpush1.bf16.msra.mxu0 0
        %1021 = vmatprep.subr.bf16.mxu0 0
        %1022 = vmatpush1.bf16.msra.mxu0 0
        %1023 = vmatprep.mubr.bf16.mxu0 0
        %1024 = vmatmul.mubr.bf16.gmra.mrb[0].mxu0 %v986
        %v1025 = vpop.f32.mrb[0].mxu0
        %v1026 = vadd.f32 0.0, %v1025
        %v1027 = vpop.f32.mrb[0].mxu0
        %v1028 = vpop.f32.mrb[0].mxu0
        %v1029 = vpop.f32.mrb[0].mxu0
        %1030 = vdwg.mxu0
        %v1031 = vadd.f32 %v888, %v934
        %v1032 = vadd.f32 %v1031, %v980
        %v1033 = vadd.f32 %v1032, %v1026
        %1034 = vst.msk [vmem:[%s161] sm:$0xff] %vm197, %v1033
        %s1035 = sand.u32 %s93, 1
        %s1036 = scalar_lea.sflag [#allocation3], %s1035
        %s1037 = sand.u32 %s93, 1
        %s1038 = smul.addr %s1037, 8
        %s1039 = scalar_lea.vmem [#allocation2], %s1038
        // Predicated region
        $region33: #{tpu_custom_call.1} parent=31 // pred_check
          %p1040 = pneg %p103
        $region34: #{tpu_custom_call.1} parent=31 // pred_check_branch
          %1042 = sbr.rel (%p1040) target = $region36
        $region35: #{tpu_custom_call.1} parent=31 // pred_region
          %s1044 = ssub.s32 128, 128
          %1045 = vsyncadd %s1036, %s1044
          %s1046 = smul.addr %s17, 128
          %s1047 = scalar_lea.hbm %s3, %s1046
          %s1049 = sshll.u32 %s1039, 4
          %s1050 = int_to_ptr.vmem [resolvable:$true] %s1049
          %1052 = dma.vmem_to_hbm [thread:$0]  %s1050, 128, %s1047, %s1036
        $region36: #{tpu_custom_call.1} parent=31 // pred_fallthru
          _
      $region32: #{tpu_custom_call.1} parent=5 // pred_fallthru
        _
      %p1053 = scmp.le.s32.totalorder 2, %s12
      // Predicated region
      $region37: #{tpu_custom_call.1} parent=5 // pred_check
        %p1054 = pneg %p1053
      $region38: #{tpu_custom_call.1} parent=5 // pred_check_branch
        %1056 = sbr.rel (%p1054) target = $region40
      $region39: #{tpu_custom_call.1} parent=5 // pred_region
        %s1057 = ssub.s32 %s12, 2
        // Predicated region
        $region41: #{tpu_custom_call.1} parent=39 // pred_check
          %p1058 = pneg %p109
        $region42: #{tpu_custom_call.1} parent=39 // pred_check_branch
          %1060 = sbr.rel (%p1058) target = $region44
        $region43: #{tpu_custom_call.1} parent=39 // pred_region
          %s1061 = sand.u32 %s94, 1
          %s1062 = scalar_lea.sflag [#allocation3], %s1061
          %s1063 = sand.u32 %s94, 1
          %s1064 = smul.addr %s1063, 8
          %s1065 = scalar_lea.vmem [#allocation2], %s1064
          %1066 = dma.done %s1062, 128
        $region44: #{tpu_custom_call.1} parent=39 // pred_fallthru
          _
      $region40: #{tpu_custom_call.1} parent=5 // pred_fallthru
        _
    $region6: #{tpu_custom_call.1} parent=1 // loop_footer
      %s16 = sadd.s32 1, %s12
    $region7: #{tpu_custom_call.1} parent=1 // loop_footer_branch
      %11 = sbr.rel target = $region3
    $region8: #{tpu_custom_call.1} parent=1 // loop_exit
      _
    %1067 = vsyncpa [#allocation3], 1
    %s1068 = scalar_lea.sflag [#allocation3], 1
    %1069 = vsyncpa %s1068, 1

</llo_original>
